<compile_context>
chip_gen: v7x
topology: tpu7x:2x2x1
jax: 0.10.0
libtpu: 0.0.40
codegen_flags: <defaults>
</compile_context>

<pallas_src>
import functools

import jax
import jax.numpy as jnp
from jax.experimental import pallas as pl
from jax.experimental.pallas import tpu as pltpu

_PAD = 128            # every feature dim of this model fits one MXU tile
_NUM_FUSED_LAYERS = 6  # f1, f2, f3, [c1|d1], [c2|d2], [c3|domain-passthrough]
_C2_WIDTH = 20        # c_fc2 output width (lanes < _C2_WIDTH get the ReLU in L4)
_N_DOMAIN = 2         # domain classifier output width
_D1_COL = 64          # lane offset of the d_fc1 branch inside fused layer 3/4


def _round_up(x, m):
    return ((x + m - 1) // m) * m


def _fc_fused_kernel(x_ref, w_ref, b_ref, out_ref, *, n_in_pad):
    """Whole MLP for one batch tile.

    x_ref   : [tile_b, n_in_pad]   bf16  (zero-padded input lanes)
    w_ref   : [6, 128, 128]        bf16  (packed / fused weight slab, [in, out])
    b_ref   : [6, 1, 128]          f32   (packed bias slab)
    out_ref : [tile_b, 128]        bf16  (lanes 0..3 class logits, 4..5 domain)
    """

    def dense(h, layer, *, relu, kdim=_PAD):
        w = w_ref[layer, :kdim, :] if kdim != _PAD else w_ref[layer]
        y = jnp.dot(h.astype(jnp.bfloat16), w,
                    preferred_element_type=jnp.float32) + b_ref[layer]
        return jnp.maximum(y, 0.0) if relu else y

    x = x_ref[...]

    # Feature extractor: fc1 -> fc2 -> fc3, ReLU each.
    h = dense(x, 0, relu=True, kdim=n_in_pad)
    h = dense(h, 1, relu=True)
    feature = dense(h, 2, relu=True)

    # ReverseLayerF forward == identity; both heads consume `feature`.
    # L3: fused [c_fc1 | d_fc1]; both branches are ReLU'd.
    h = dense(feature, 3, relu=True)

    # L4: fused block-diagonal [c_fc2 | d_fc2]; ReLU only the class lanes,
    # the raw domain logits sit in lanes _C2_WIDTH.._C2_WIDTH+1 (no ReLU).
    h = dense(h, 4, relu=False)
    lane = jax.lax.broadcasted_iota(jnp.int32, h.shape, 1)
    h = jnp.where(lane < _C2_WIDTH, jnp.maximum(h, 0.0), h)

    # L5: c_fc3 plus identity passthrough of the domain logits -> packed row.
    out = dense(h, 5, relu=False)
    out_ref[...] = out.astype(out_ref.dtype)


def pack_params(params):
    """Pack/fuse per-layer weights & biases into two slabs (done once)."""
    n_out = params["c_w3"].shape[1]
    w_slab = jnp.zeros((_NUM_FUSED_LAYERS, _PAD, _PAD), jnp.float32)
    b_slab = jnp.zeros((_NUM_FUSED_LAYERS, 1, _PAD), jnp.float32)

    def put_w(slab, layer, row0, col0, w):
        return slab.at[layer, row0:row0 + w.shape[0],
                       col0:col0 + w.shape[1]].set(w)

    def put_b(slab, layer, col0, b):
        return slab.at[layer, :, col0:col0 + b.shape[1]].set(b)

    # L0..L2: feature extractor.
    w_slab = put_w(w_slab, 0, 0, 0, params["f_w1"])
    b_slab = put_b(b_slab, 0, 0, params["f_b1"])
    w_slab = put_w(w_slab, 1, 0, 0, params["f_w2"])
    b_slab = put_b(b_slab, 1, 0, params["f_b2"])
    w_slab = put_w(w_slab, 2, 0, 0, params["f_w3"])
    b_slab = put_b(b_slab, 2, 0, params["f_b3"])

    # L3: fused c_fc1 (cols 0..39) | d_fc1 (cols 64..103).
    w_slab = put_w(w_slab, 3, 0, 0, params["c_w1"])
    b_slab = put_b(b_slab, 3, 0, params["c_b1"])
    w_slab = put_w(w_slab, 3, 0, _D1_COL, params["d_w1"])
    b_slab = put_b(b_slab, 3, _D1_COL, params["d_b1"])

    # L4: block-diagonal c_fc2 (rows 0..39 -> cols 0..19)
    #                    d_fc2 (rows 64..103 -> cols 20..21).
    w_slab = put_w(w_slab, 4, 0, 0, params["c_w2"])
    b_slab = put_b(b_slab, 4, 0, params["c_b2"])
    w_slab = put_w(w_slab, 4, _D1_COL, _C2_WIDTH, params["d_w2"])
    b_slab = put_b(b_slab, 4, _C2_WIDTH, params["d_b2"])

    # L5: c_fc3 (rows 0..19 -> cols 0..n_out-1) plus identity passthrough of
    # the domain logits (rows 20..21 -> cols n_out..n_out+1).
    w_slab = put_w(w_slab, 5, 0, 0, params["c_w3"])
    b_slab = put_b(b_slab, 5, 0, params["c_b3"])
    w_slab = put_w(w_slab, 5, _C2_WIDTH, n_out,
                   jnp.eye(_N_DOMAIN, dtype=jnp.float32))

    # Weights in bf16 for the MXU; biases stay f32 (f32 VPU add on all chips).
    return w_slab.astype(jnp.bfloat16), b_slab


def fc_model_forward(x, w_slab, b_slab, alpha=1.0, n_out_classes=4):
    """Fused forward pass. Returns (class_output, domain_output)."""
    del alpha  # gradient-reversal only; forward is identity
    batch, n_in = x.shape
    n_in_pad = _round_up(n_in, 16)
    assert n_in_pad <= _PAD, "input feature dim must fit one MXU tile"

    # Adaptive batch tiling: ~1024-row tiles, padding waste bounded, and at
    # least 2 (even) grid steps for large batches so both v7x cores run.
    target_tile = 1024
    steps = -(-batch // target_tile)
    if batch > 512:
        steps = max(steps, 2)
    if steps > 1 and steps % 2:
        steps += 1
    tile_b = _round_up(-(-batch // steps), 16)   # bf16-native sublane multiple
    padded_batch = steps * tile_b

    # bf16 input, lane-padded only to the (tiny) n_in_pad, not to 128.
    x_p = jnp.zeros((padded_batch, n_in_pad), jnp.bfloat16)
    x_p = x_p.at[:batch, :n_in].set(x.astype(jnp.bfloat16))

    real_macs = (n_in * 100 + 100 * 80 + 80 * 60 + 60 * 40 + 40 * 20
                 + 20 * n_out_classes + 60 * 40 + 40 * 2)
    cost = pl.CostEstimate(
        flops=2 * padded_batch * real_macs,
        transcendentals=0,
        bytes_accessed=int(w_slab.size) * 2 + int(b_slab.size) * 4
        + padded_batch * n_in_pad * 2          # bf16 input
        + padded_batch * _PAD * 2,             # bf16 packed output
    )

    kernel = functools.partial(_fc_fused_kernel, n_in_pad=n_in_pad)

    out = pl.pallas_call(
        kernel,
        out_shape=jax.ShapeDtypeStruct((padded_batch, _PAD), jnp.bfloat16),
        grid_spec=pltpu.PrefetchScalarGridSpec(
            num_scalar_prefetch=0,
            grid=(steps,),
            in_specs=[
                pl.BlockSpec((tile_b, n_in_pad), lambda i: (i, 0)),
                # Weights/biases resident: same block every step -> no re-DMA.
                pl.BlockSpec((_NUM_FUSED_LAYERS, _PAD, _PAD),
                             lambda i: (0, 0, 0)),
                pl.BlockSpec((_NUM_FUSED_LAYERS, 1, _PAD),
                             lambda i: (0, 0, 0)),
            ],
            out_specs=pl.BlockSpec((tile_b, _PAD), lambda i: (i, 0)),
        ),
        compiler_params=pltpu.CompilerParams(
            dimension_semantics=("parallel",)),
        cost_estimate=cost,
    )(x_p, w_slab, b_slab)

    class_out = out[:batch, :n_out_classes].astype(jnp.float32)
    domain_out = out[:batch,
                     n_out_classes:n_out_classes + _N_DOMAIN].astype(jnp.float32)
    return class_out, domain_out


def init_params(key, n_in_features, n_out_classes=4):
    """Deterministic parameter init (PyTorch Linear-style uniform ±1/sqrt(fan_in))."""
    dims = {
        "f_1": (n_in_features, 100),
        "f_2": (100, 80),
        "f_3": (80, 60),
        "c_1": (60, 40),
        "c_2": (40, 20),
        "c_3": (20, n_out_classes),
        "d_1": (60, 40),
        "d_2": (40, 2),
    }
    params = {}
    for name, (fan_in, fan_out) in dims.items():
        key, kw, kb = jax.random.split(key, 3)
        bound = 1.0 / jnp.sqrt(jnp.float32(fan_in))
        head, idx = name.split("_")
        params[f"{head}_w{idx}"] = jax.random.uniform(
            kw, (fan_in, fan_out), jnp.float32, -bound, bound)
        params[f"{head}_b{idx}"] = jax.random.uniform(
            kb, (1, fan_out), jnp.float32, -bound, bound)
    return params


def _reference_forward(x, params):
    """Pure-JAX reference using the same bf16-weight / f32-accumulate scheme."""
    def dense(h, w, b, relu):
        y = jnp.dot(h.astype(jnp.bfloat16), w.astype(jnp.bfloat16),
                    preferred_element_type=jnp.float32) + b
        return jnp.maximum(y, 0.0) if relu else y

    h = dense(x, params["f_w1"], params["f_b1"], True)
    h = dense(h, params["f_w2"], params["f_b2"], True)
    feat = dense(h, params["f_w3"], params["f_b3"], True)
    c = dense(feat, params["c_w1"], params["c_b1"], True)
    c = dense(c, params["c_w2"], params["c_b2"], True)
    c = dense(c, params["c_w3"], params["c_b3"], False)
    d = dense(feat, params["d_w1"], params["d_b1"], True)
    d = dense(d, params["d_w2"], params["d_b2"], False)
    return c, d


if __name__ == "__main__":
    key = jax.random.PRNGKey(0)
    k_params, k_x = jax.random.split(key)

    batch = 8
    n_in_features = 32
    n_out_classes = 4

    params = init_params(k_params, n_in_features, n_out_classes)
    w_slab, b_slab = pack_params(params)
    x = jax.random.normal(k_x, (batch, n_in_features), jnp.float32)
    alpha = 0.5  # forward output does not depend on alpha (gradient-reversal only)

    class_out, domain_out = jax.block_until_ready(
        fc_model_forward(x, w_slab, b_slab, alpha, n_out_classes))

    ref_class, ref_domain = _reference_forward(x, params)
    assert class_out.shape == (batch, n_out_classes)
    assert domain_out.shape == (batch, 2)
    assert jnp.allclose(class_out, ref_class, atol=2e-2, rtol=2e-2)
    assert jnp.allclose(domain_out, ref_domain, atol=2e-2, rtol=2e-2)

    print("KERNEL_OK")
</pallas_src>

<mosaic_0001>
module attributes {stable_mosaic.version = 11 : i64} {
  func.func @_fc_fused_kernel(%arg0: i32, %arg1: memref<16x32xbf16, #tpu.memory_space<vmem>>, %arg2: memref<6x128x128xbf16, #tpu.memory_space<vmem>>, %arg3: memref<6x1x128xf32, #tpu.memory_space<vmem>>, %arg4: memref<16x128xbf16, #tpu.memory_space<vmem>>) attributes {dimension_semantics = [#tpu.dimension_semantics<parallel>], iteration_bounds = array<i64: 1>, scalar_prefetch = 0 : i64, scratch_operands = 0 : i64, tpu.core_type = #tpu.core_type<tc>, window_params = [{transform_indices = @transform_0, window_bounds = array<i64: 16, 32>}, {pipeline_mode = #tpu.pipeline_mode<synchronous>, transform_indices = @transform_1, window_bounds = array<i64: 6, 128, 128>}, {pipeline_mode = #tpu.pipeline_mode<synchronous>, transform_indices = @transform_2, window_bounds = array<i64: 6, 1, 128>}, {transform_indices = @transform_3, window_bounds = array<i64: 16, 128>}]} {
    %c0 = arith.constant 0 : index
    %c0_0 = arith.constant 0 : index
    %0 = vector.load %arg1[%c0, %c0_0] : memref<16x32xbf16, #tpu.memory_space<vmem>>, vector<16x32xbf16>
    %c0_1 = arith.constant 0 : index
    %c0_2 = arith.constant 0 : index
    %c0_3 = arith.constant 0 : index
    %1 = vector.load %arg2[%c0_1, %c0_2, %c0_3] : memref<6x128x128xbf16, #tpu.memory_space<vmem>>, vector<1x32x128xbf16>
    %2 = vector.shape_cast %1 : vector<1x32x128xbf16> to vector<32x128xbf16>
    %cst = arith.constant dense<0.000000e+00> : vector<16x128xf32>
    %3 = tpu.matmul %0, %2, %cst {dimension_numbers = #tpu.dot_dimension_numbers<[1], [0], [0], [1], [0, 0, 1, 1], [], []>} : vector<16x32xbf16>, vector<32x128xbf16>, vector<16x128xf32> -> vector<16x128xf32>
    %c0_4 = arith.constant 0 : index
    %c0_5 = arith.constant 0 : index
    %c0_6 = arith.constant 0 : index
    %4 = vector.load %arg3[%c0_4, %c0_5, %c0_6] : memref<6x1x128xf32, #tpu.memory_space<vmem>>, vector<1x1x128xf32>
    %5 = vector.shape_cast %4 : vector<1x1x128xf32> to vector<1x128xf32>
    %6 = vector.broadcast %5 : vector<1x128xf32> to vector<16x128xf32>
    %7 = arith.addf %3, %6 : vector<16x128xf32>
    %cst_7 = arith.constant 0.000000e+00 : f32
    %8 = vector.broadcast %cst_7 : f32 to vector<16x128xf32>
    %9 = arith.maximumf %7, %8 : vector<16x128xf32>
    %c1 = arith.constant 1 : index
    %c0_8 = arith.constant 0 : index
    %c0_9 = arith.constant 0 : index
    %10 = vector.load %arg2[%c1, %c0_8, %c0_9] : memref<6x128x128xbf16, #tpu.memory_space<vmem>>, vector<1x128x128xbf16>
    %11 = vector.shape_cast %10 : vector<1x128x128xbf16> to vector<128x128xbf16>
    %12 = arith.truncf %9 : vector<16x128xf32> to vector<16x128xbf16>
    %cst_10 = arith.constant dense<0.000000e+00> : vector<16x128xf32>
    %13 = tpu.matmul %12, %11, %cst_10 {dimension_numbers = #tpu.dot_dimension_numbers<[1], [0], [0], [1], [0, 0, 1, 1], [], []>} : vector<16x128xbf16>, vector<128x128xbf16>, vector<16x128xf32> -> vector<16x128xf32>
    %c1_11 = arith.constant 1 : index
    %c0_12 = arith.constant 0 : index
    %c0_13 = arith.constant 0 : index
    %14 = vector.load %arg3[%c1_11, %c0_12, %c0_13] : memref<6x1x128xf32, #tpu.memory_space<vmem>>, vector<1x1x128xf32>
    %15 = vector.shape_cast %14 : vector<1x1x128xf32> to vector<1x128xf32>
    %16 = vector.broadcast %15 : vector<1x128xf32> to vector<16x128xf32>
    %17 = arith.addf %13, %16 : vector<16x128xf32>
    %cst_14 = arith.constant 0.000000e+00 : f32
    %18 = vector.broadcast %cst_14 : f32 to vector<16x128xf32>
    %19 = arith.maximumf %17, %18 : vector<16x128xf32>
    %c2 = arith.constant 2 : index
    %c0_15 = arith.constant 0 : index
    %c0_16 = arith.constant 0 : index
    %20 = vector.load %arg2[%c2, %c0_15, %c0_16] : memref<6x128x128xbf16, #tpu.memory_space<vmem>>, vector<1x128x128xbf16>
    %21 = vector.shape_cast %20 : vector<1x128x128xbf16> to vector<128x128xbf16>
    %22 = arith.truncf %19 : vector<16x128xf32> to vector<16x128xbf16>
    %cst_17 = arith.constant dense<0.000000e+00> : vector<16x128xf32>
    %23 = tpu.matmul %22, %21, %cst_17 {dimension_numbers = #tpu.dot_dimension_numbers<[1], [0], [0], [1], [0, 0, 1, 1], [], []>} : vector<16x128xbf16>, vector<128x128xbf16>, vector<16x128xf32> -> vector<16x128xf32>
    %c2_18 = arith.constant 2 : index
    %c0_19 = arith.constant 0 : index
    %c0_20 = arith.constant 0 : index
    %24 = vector.load %arg3[%c2_18, %c0_19, %c0_20] : memref<6x1x128xf32, #tpu.memory_space<vmem>>, vector<1x1x128xf32>
    %25 = vector.shape_cast %24 : vector<1x1x128xf32> to vector<1x128xf32>
    %26 = vector.broadcast %25 : vector<1x128xf32> to vector<16x128xf32>
    %27 = arith.addf %23, %26 : vector<16x128xf32>
    %cst_21 = arith.constant 0.000000e+00 : f32
    %28 = vector.broadcast %cst_21 : f32 to vector<16x128xf32>
    %29 = arith.maximumf %27, %28 : vector<16x128xf32>
    %c3 = arith.constant 3 : index
    %c0_22 = arith.constant 0 : index
    %c0_23 = arith.constant 0 : index
    %30 = vector.load %arg2[%c3, %c0_22, %c0_23] : memref<6x128x128xbf16, #tpu.memory_space<vmem>>, vector<1x128x128xbf16>
    %31 = vector.shape_cast %30 : vector<1x128x128xbf16> to vector<128x128xbf16>
    %32 = arith.truncf %29 : vector<16x128xf32> to vector<16x128xbf16>
    %cst_24 = arith.constant dense<0.000000e+00> : vector<16x128xf32>
    %33 = tpu.matmul %32, %31, %cst_24 {dimension_numbers = #tpu.dot_dimension_numbers<[1], [0], [0], [1], [0, 0, 1, 1], [], []>} : vector<16x128xbf16>, vector<128x128xbf16>, vector<16x128xf32> -> vector<16x128xf32>
    %c3_25 = arith.constant 3 : index
    %c0_26 = arith.constant 0 : index
    %c0_27 = arith.constant 0 : index
    %34 = vector.load %arg3[%c3_25, %c0_26, %c0_27] : memref<6x1x128xf32, #tpu.memory_space<vmem>>, vector<1x1x128xf32>
    %35 = vector.shape_cast %34 : vector<1x1x128xf32> to vector<1x128xf32>
    %36 = vector.broadcast %35 : vector<1x128xf32> to vector<16x128xf32>
    %37 = arith.addf %33, %36 : vector<16x128xf32>
    %cst_28 = arith.constant 0.000000e+00 : f32
    %38 = vector.broadcast %cst_28 : f32 to vector<16x128xf32>
    %39 = arith.maximumf %37, %38 : vector<16x128xf32>
    %c4 = arith.constant 4 : index
    %c0_29 = arith.constant 0 : index
    %c0_30 = arith.constant 0 : index
    %40 = vector.load %arg2[%c4, %c0_29, %c0_30] : memref<6x128x128xbf16, #tpu.memory_space<vmem>>, vector<1x128x128xbf16>
    %41 = vector.shape_cast %40 : vector<1x128x128xbf16> to vector<128x128xbf16>
    %42 = arith.truncf %39 : vector<16x128xf32> to vector<16x128xbf16>
    %cst_31 = arith.constant dense<0.000000e+00> : vector<16x128xf32>
    %43 = tpu.matmul %42, %41, %cst_31 {dimension_numbers = #tpu.dot_dimension_numbers<[1], [0], [0], [1], [0, 0, 1, 1], [], []>} : vector<16x128xbf16>, vector<128x128xbf16>, vector<16x128xf32> -> vector<16x128xf32>
    %c4_32 = arith.constant 4 : index
    %c0_33 = arith.constant 0 : index
    %c0_34 = arith.constant 0 : index
    %44 = vector.load %arg3[%c4_32, %c0_33, %c0_34] : memref<6x1x128xf32, #tpu.memory_space<vmem>>, vector<1x1x128xf32>
    %45 = vector.shape_cast %44 : vector<1x1x128xf32> to vector<1x128xf32>
    %46 = vector.broadcast %45 : vector<1x128xf32> to vector<16x128xf32>
    %47 = arith.addf %43, %46 : vector<16x128xf32>
    %48 = tpu.iota {dimensions = array<i32: 1>} : vector<16x128xi32>
    %c20_i32 = arith.constant 20 : i32
    %49 = vector.broadcast %c20_i32 : i32 to vector<16x128xi32>
    %50 = arith.cmpi slt, %48, %49 : vector<16x128xi32>
    %cst_35 = arith.constant 0.000000e+00 : f32
    %51 = vector.broadcast %cst_35 : f32 to vector<16x128xf32>
    %52 = arith.maximumf %47, %51 : vector<16x128xf32>
    %53 = arith.select %50, %52, %47 : vector<16x128xi1>, vector<16x128xf32>
    %c5 = arith.constant 5 : index
    %c0_36 = arith.constant 0 : index
    %c0_37 = arith.constant 0 : index
    %54 = vector.load %arg2[%c5, %c0_36, %c0_37] : memref<6x128x128xbf16, #tpu.memory_space<vmem>>, vector<1x128x128xbf16>
    %55 = vector.shape_cast %54 : vector<1x128x128xbf16> to vector<128x128xbf16>
    %56 = arith.truncf %53 : vector<16x128xf32> to vector<16x128xbf16>
    %cst_38 = arith.constant dense<0.000000e+00> : vector<16x128xf32>
    %57 = tpu.matmul %56, %55, %cst_38 {dimension_numbers = #tpu.dot_dimension_numbers<[1], [0], [0], [1], [0, 0, 1, 1], [], []>} : vector<16x128xbf16>, vector<128x128xbf16>, vector<16x128xf32> -> vector<16x128xf32>
    %c5_39 = arith.constant 5 : index
    %c0_40 = arith.constant 0 : index
    %c0_41 = arith.constant 0 : index
    %58 = vector.load %arg3[%c5_39, %c0_40, %c0_41] : memref<6x1x128xf32, #tpu.memory_space<vmem>>, vector<1x1x128xf32>
    %59 = vector.shape_cast %58 : vector<1x1x128xf32> to vector<1x128xf32>
    %60 = vector.broadcast %59 : vector<1x128xf32> to vector<16x128xf32>
    %61 = arith.addf %57, %60 : vector<16x128xf32>
    %62 = arith.truncf %61 : vector<16x128xf32> to vector<16x128xbf16>
    %c0_42 = arith.constant 0 : index
    %c0_43 = arith.constant 0 : index
    %63 = vector.load %arg4[%c0_42, %c0_43] : memref<16x128xbf16, #tpu.memory_space<vmem>>, vector<16x128xbf16>
    tpu.vector_store %arg4[%c0_42, %c0_43], %62 {strides = array<i32>} : memref<16x128xbf16, #tpu.memory_space<vmem>>, vector<16x128xbf16>,
    return
  }
  func.func @transform_0(%arg0: i32) -> (i32, i32) {
    %c0_i32 = arith.constant 0 : i32
    %c0_i32_0 = arith.constant 0 : i32
    return %arg0, %c0_i32 : i32, i32
  }
  func.func @transform_1(%arg0: i32) -> (i32, i32, i32) {
    %c0_i32 = arith.constant 0 : i32
    %c0_i32_0 = arith.constant 0 : i32
    %c0_i32_1 = arith.constant 0 : i32
    %c0_i32_2 = arith.constant 0 : i32
    return %c0_i32, %c0_i32_0, %c0_i32_1 : i32, i32, i32
  }
  func.func @transform_2(%arg0: i32) -> (i32, i32, i32) {
    %c0_i32 = arith.constant 0 : i32
    %c0_i32_0 = arith.constant 0 : i32
    %c0_i32_1 = arith.constant 0 : i32
    %c0_i32_2 = arith.constant 0 : i32
    return %c0_i32, %c0_i32_0, %c0_i32_1 : i32, i32, i32
  }
  func.func @transform_3(%arg0: i32) -> (i32, i32) {
    %c0_i32 = arith.constant 0 : i32
    %c0_i32_0 = arith.constant 0 : i32
    return %arg0, %c0_i32 : i32, i32
  }
}

</mosaic_0001>

<llo_original>
// kernel: tpu_custom_call.1
$region0: #{tpu_custom_call.1}
  #allocation0 [shape = 'u32[]', space=smem, size = 0x4, offset = 0x4, fixed_abs, tag = 'smem constant byte address 0x4 - core index']
  #allocation1 [shape = 'u32[144,128]{1,0:T(1,128)}', space=vmem, size = 0x12000, scoped, tag = 'internal scratch']
  %s0 = inlined_call_operand.hbm [shape: bf16[16,32], index: 0, kind: input, shape index: {}]
  %s1 = inlined_call_operand.hbm [shape: bf16[6,128,128], index: 1, kind: input, shape index: {}]
  %s2 = inlined_call_operand.vmem [shape: f32[6,1,128], index: 2, kind: input, shape index: {}]
  %s3 = inlined_call_operand.hbm [shape: bf16[16,128], index: 3, kind: output, shape index: {}]
  %s4 = sld [smem:[#allocation0]]
  $region30: #{tpu_custom_call.1} parent=0
    _
  %s6 = ssub.s32 1, %s4
  %s7 = scalar_select 0, %s6, %s4
  $region1: #{tpu_custom_call.1} parent=0
    #allocation2 [shape = 'u8[4096]{0}', space=vmem, size = 0x1000, scoped, tag = 'input window, operand 0, single buffered']
    #allocation3 [shape = 's32[1]{0}', space=sflag, size = 0x4, scoped, tag = 'scoped memory for tpu_custom_call.1']
    #allocation4 [shape = 's32[1]{0}', space=sflag, size = 0x4, scoped, tag = 'scoped memory for tpu_custom_call.1']
    #allocation5 [shape = 'u8[196608]{0}', space=vmem, size = 0x30000, scoped, tag = 'input window, operand 1, single buffered']
    #allocation6 [shape = 's32[1]{0}', space=sflag, size = 0x4, scoped, tag = 'scoped memory for tpu_custom_call.1']
    #allocation7 [shape = 'u8[4096]{0}', space=vmem, size = 0x1000, scoped, tag = 'output window, operand 0, single buffered']
    %8 = vsyncpa [#allocation3], 0
    %9 = vsyncpa [#allocation6], 0
    %10 = vsyncpa [#allocation4], 0
    // Predicated region
    $region2: #{tpu_custom_call.1} parent=1 // pred_check
      _
    $region3: #{tpu_custom_call.1} parent=1 // pred_check_branch
      %12 = sbr.rel (0) target = $region5
    $region4: #{tpu_custom_call.1} parent=1 // pred_region
      %s14 = ssub.s32 128, 128
      %15 = vsyncadd [#allocation3], %s14
      %s16 = sshll.u32 [#allocation2], 4
      %s17 = int_to_ptr.vmem [resolvable:$true] %s16
      %22 = dma.hbm_to_vmem [thread:$0]  %s0, 128, %s17, [#allocation3], 64, 64, 4
    $region5: #{tpu_custom_call.1} parent=1 // pred_fallthru
      _
    // Predicated region
    $region6: #{tpu_custom_call.1} parent=1 // pred_check
      _
    $region7: #{tpu_custom_call.1} parent=1 // pred_check_branch
      %24 = sbr.rel (0) target = $region9
    $region8: #{tpu_custom_call.1} parent=1 // pred_region
      %s26 = ssub.s32 6144, 6144
      %27 = vsyncadd [#allocation6], %s26
      %s28 = sshll.u32 [#allocation5], 4
      %s29 = int_to_ptr.vmem [resolvable:$true] %s28
      %34 = dma.hbm_to_vmem [thread:$0]  %s1, 6144, %s29, [#allocation6], 64, 64, 4
    $region9: #{tpu_custom_call.1} parent=1 // pred_fallthru
      _
    // Predicated region
    $region10: #{tpu_custom_call.1} parent=1 // pred_check
      _
    $region11: #{tpu_custom_call.1} parent=1 // pred_check_branch
      %36 = sbr.rel (0) target = $region13
    $region12: #{tpu_custom_call.1} parent=1 // pred_region
      _
    $region13: #{tpu_custom_call.1} parent=1 // pred_fallthru
      _
    // Predicated region
    $region14: #{tpu_custom_call.1} parent=1 // pred_check
      _
    $region15: #{tpu_custom_call.1} parent=1 // pred_check_branch
      %38 = sbr.rel (0) target = $region17
    $region16: #{tpu_custom_call.1} parent=1 // pred_region
      %39 = dma.done [#allocation3], 128
    $region17: #{tpu_custom_call.1} parent=1 // pred_fallthru
      _
    // Predicated region
    $region18: #{tpu_custom_call.1} parent=1 // pred_check
      _
    $region19: #{tpu_custom_call.1} parent=1 // pred_check_branch
      %41 = sbr.rel (0) target = $region21
    $region20: #{tpu_custom_call.1} parent=1 // pred_region
      %42 = dma.done [#allocation6], 6144
    $region21: #{tpu_custom_call.1} parent=1 // pred_fallthru
      _
    %v44 = vld [vmem:[#allocation2] sm:$0xf]
    %v45 = vld [vmem:[#allocation2 + $0x4] sm:$0xf]
    %v46 = vld [vmem:[#allocation5] sm:$0xf]
    %v47 = vld [vmem:[#allocation5 + $0x4] sm:$0xf]
    %v48 = vld [vmem:[#allocation5 + $0x8] sm:$0xf]
    %v49 = vld [vmem:[#allocation5 + $0xc] sm:$0xf]
    %v50 = vld [vmem:[%s2] sm:$0x1]
    %v52 = vlaneseq
    %v53 = vshrl.u32 %v52, 7
    %v54 = vsub.s32 0, %v53
    %v55 = vrot.slane %v50, %v54
    %v59 = vunpack.c.l.b16 %v44
    %v60 = vunpack.c.l.b16 %v45
    %v61 = vpack.c.b16 %v60, %v59
    %v66 = vunpack.c.l.b16 %v46
    %v67 = vunpack.c.l.b16 %v47
    %v68 = vunpack.c.l.b16 %v48
    %v69 = vunpack.c.l.b16 %v49
    %v70 = vpack.c.b16 %v67, %v66
    %v71 = vpack.c.b16 %v69, %v68
    %vm74 = vcmask 261120
    %v76 = vsel %vm74, %v61, 0
    %78 = vmatprep.subr.bf16.mxu0 0
    %79 = vmatpush1.bf16.msra.mxu0 %v70
    %80 = vmatprep.subr.bf16.mxu0 0
    %81 = vmatpush1.bf16.msra.mxu0 %v71
    %82 = vmatprep.subr.bf16.mxu0 0
    %83 = vmatpush1.bf16.msra.mxu0 0
    %84 = vmatprep.subr.bf16.mxu0 0
    %85 = vmatpush1.bf16.msra.mxu0 0
    %86 = vmatprep.subr.bf16.mxu0 0
    %87 = vmatpush1.bf16.msra.mxu0 0
    %88 = vmatprep.subr.bf16.mxu0 0
    %89 = vmatpush1.bf16.msra.mxu0 0
    %90 = vmatprep.subr.bf16.mxu0 0
    %91 = vmatpush1.bf16.msra.mxu0 0
    %92 = vmatprep.subr.bf16.mxu0 0
    %93 = vmatpush1.bf16.msra.mxu0 0
    %94 = vmatprep.subr.bf16.mxu0 0
    %95 = vmatpush1.bf16.msra.mxu0 0
    %96 = vmatprep.subr.bf16.mxu0 0
    %97 = vmatpush1.bf16.msra.mxu0 0
    %98 = vmatprep.subr.bf16.mxu0 0
    %99 = vmatpush1.bf16.msra.mxu0 0
    %100 = vmatprep.subr.bf16.mxu0 0
    %101 = vmatpush1.bf16.msra.mxu0 0
    %102 = vmatprep.subr.bf16.mxu0 0
    %103 = vmatpush1.bf16.msra.mxu0 0
    %104 = vmatprep.subr.bf16.mxu0 0
    %105 = vmatpush1.bf16.msra.mxu0 0
    %106 = vmatprep.subr.bf16.mxu0 0
    %107 = vmatpush1.bf16.msra.mxu0 0
    %108 = vmatprep.subr.bf16.mxu0 0
    %109 = vmatpush1.bf16.msra.mxu0 0
    %110 = vmatprep.mubr.bf16.mxu0 0
    %111 = vmatmul.mubr.bf16.gmra.mrb[0].mxu0 %v76
    %v112 = vpop.f32.mrb[0].mxu0
    %v113 = vadd.f32 %v55, %v112
    %v114 = vpop.f32.mrb[0].mxu0
    %v115 = vpop.f32.mrb[0].mxu0
    %v116 = vadd.f32 %v55, %v115
    %v117 = vpop.f32.mrb[0].mxu0
    %118 = vdwg.mxu0
    %v119 = vmax.f32 %v113, 0.0
    %v120 = vmax.f32 %v116, 0.0
    %s121 = scalar_lea.vmem [#allocation5], 64
    %v122 = vld [vmem:[%s121] sm:$0xf]
    %v123 = vld [vmem:[%s121 + $0x4] sm:$0xf]
    %v124 = vld [vmem:[%s121 + $0x8] sm:$0xf]
    %v125 = vld [vmem:[%s121 + $0xc] sm:$0xf]
    %v126 = vld [vmem:[%s121 + $0x10] sm:$0xf]
    %v127 = vld [vmem:[%s121 + $0x14] sm:$0xf]
    %v128 = vld [vmem:[%s121 + $0x18] sm:$0xf]
    %v129 = vld [vmem:[%s121 + $0x1c] sm:$0xf]
    %v130 = vld [vmem:[%s121 + $0x20] sm:$0xf]
    %v131 = vld [vmem:[%s121 + $0x24] sm:$0xf]
    %v132 = vld [vmem:[%s121 + $0x28] sm:$0xf]
    %v133 = vld [vmem:[%s121 + $0x2c] sm:$0xf]
    %v134 = vld [vmem:[%s121 + $0x30] sm:$0xf]
    %v135 = vld [vmem:[%s121 + $0x34] sm:$0xf]
    %v136 = vld [vmem:[%s121 + $0x38] sm:$0xf]
    %v137 = vld [vmem:[%s121 + $0x3c] sm:$0xf]
    %v138 = vpack.c.bf16 %v120, %v119
    %s139 = scalar_lea.vmem %s2, 1
    %v140 = vld [vmem:[%s139] sm:$0x1]
    %v142 = vlaneseq
    %v143 = vshrl.u32 %v142, 7
    %v144 = vsub.s32 0, %v143
    %v145 = vrot.slane %v140, %v144
    %v163 = vunpack.c.l.b16 %v122
    %v164 = vunpack.c.l.b16 %v123
    %v165 = vunpack.c.l.b16 %v124
    %v166 = vunpack.c.l.b16 %v125
    %v167 = vunpack.c.l.b16 %v126
    %v168 = vunpack.c.l.b16 %v127
    %v169 = vunpack.c.l.b16 %v128
    %v170 = vunpack.c.l.b16 %v129
    %v171 = vunpack.c.l.b16 %v130
    %v172 = vunpack.c.l.b16 %v131
    %v173 = vunpack.c.l.b16 %v132
    %v174 = vunpack.c.l.b16 %v133
    %v175 = vunpack.c.l.b16 %v134
    %v176 = vunpack.c.l.b16 %v135
    %v177 = vunpack.c.l.b16 %v136
    %v178 = vunpack.c.l.b16 %v137
    %v179 = vpack.c.b16 %v164, %v163
    %v180 = vpack.c.b16 %v166, %v165
    %v181 = vpack.c.b16 %v168, %v167
    %v182 = vpack.c.b16 %v170, %v169
    %v183 = vpack.c.b16 %v172, %v171
    %v184 = vpack.c.b16 %v174, %v173
    %v185 = vpack.c.b16 %v176, %v175
    %v186 = vpack.c.b16 %v178, %v177
    %195 = vmatprep.subr.bf16.mxu0 0
    %196 = vmatpush1.bf16.msra.mxu0 %v179
    %197 = vmatprep.subr.bf16.mxu0 0
    %198 = vmatpush1.bf16.msra.mxu0 %v180
    %199 = vmatprep.subr.bf16.mxu0 0
    %200 = vmatpush1.bf16.msra.mxu0 %v181
    %201 = vmatprep.subr.bf16.mxu0 0
    %202 = vmatpush1.bf16.msra.mxu0 %v182
    %203 = vmatprep.subr.bf16.mxu0 0
    %204 = vmatpush1.bf16.msra.mxu0 %v183
    %205 = vmatprep.subr.bf16.mxu0 0
    %206 = vmatpush1.bf16.msra.mxu0 %v184
    %207 = vmatprep.subr.bf16.mxu0 0
    %208 = vmatpush1.bf16.msra.mxu0 %v185
    %209 = vmatprep.subr.bf16.mxu0 0
    %210 = vmatpush1.bf16.msra.mxu0 %v186
    %211 = vmatprep.subr.bf16.mxu0 0
    %212 = vmatpush1.bf16.msra.mxu0 0
    %213 = vmatprep.subr.bf16.mxu0 0
    %214 = vmatpush1.bf16.msra.mxu0 0
    %215 = vmatprep.subr.bf16.mxu0 0
    %216 = vmatpush1.bf16.msra.mxu0 0
    %217 = vmatprep.subr.bf16.mxu0 0
    %218 = vmatpush1.bf16.msra.mxu0 0
    %219 = vmatprep.subr.bf16.mxu0 0
    %220 = vmatpush1.bf16.msra.mxu0 0
    %221 = vmatprep.subr.bf16.mxu0 0
    %222 = vmatpush1.bf16.msra.mxu0 0
    %223 = vmatprep.subr.bf16.mxu0 0
    %224 = vmatpush1.bf16.msra.mxu0 0
    %225 = vmatprep.subr.bf16.mxu0 0
    %226 = vmatpush1.bf16.msra.mxu0 0
    %227 = vmatprep.mubr.bf16.mxu0 0
    %228 = vmatmul.mubr.bf16.gmra.mrb[0].mxu0 %v138
    %v229 = vpop.f32.mrb[0].mxu0
    %v230 = vadd.f32 %v145, %v229
    %v231 = vpop.f32.mrb[0].mxu0
    %v232 = vpop.f32.mrb[0].mxu0
    %v233 = vadd.f32 %v145, %v232
    %v234 = vpop.f32.mrb[0].mxu0
    %235 = vdwg.mxu0
    %v236 = vmax.f32 %v230, 0.0
    %v237 = vmax.f32 %v233, 0.0
    %s238 = scalar_lea.vmem [#allocation5], 128
    %v239 = vld [vmem:[%s238] sm:$0xf]
    %v240 = vld [vmem:[%s238 + $0x4] sm:$0xf]
    %v241 = vld [vmem:[%s238 + $0x8] sm:$0xf]
    %v242 = vld [vmem:[%s238 + $0xc] sm:$0xf]
    %v243 = vld [vmem:[%s238 + $0x10] sm:$0xf]
    %v244 = vld [vmem:[%s238 + $0x14] sm:$0xf]
    %v245 = vld [vmem:[%s238 + $0x18] sm:$0xf]
    %v246 = vld [vmem:[%s238 + $0x1c] sm:$0xf]
    %v247 = vld [vmem:[%s238 + $0x20] sm:$0xf]
    %v248 = vld [vmem:[%s238 + $0x24] sm:$0xf]
    %v249 = vld [vmem:[%s238 + $0x28] sm:$0xf]
    %v250 = vld [vmem:[%s238 + $0x2c] sm:$0xf]
    %v251 = vld [vmem:[%s238 + $0x30] sm:$0xf]
    %v252 = vld [vmem:[%s238 + $0x34] sm:$0xf]
    %v253 = vld [vmem:[%s238 + $0x38] sm:$0xf]
    %v254 = vld [vmem:[%s238 + $0x3c] sm:$0xf]
    %v255 = vpack.c.bf16 %v237, %v236
    %s256 = scalar_lea.vmem %s2, 2
    %v257 = vld [vmem:[%s256] sm:$0x1]
    %v259 = vlaneseq
    %v260 = vshrl.u32 %v259, 7
    %v261 = vsub.s32 0, %v260
    %v262 = vrot.slane %v257, %v261
    %v280 = vunpack.c.l.b16 %v239
    %v281 = vunpack.c.l.b16 %v240
    %v282 = vunpack.c.l.b16 %v241
    %v283 = vunpack.c.l.b16 %v242
    %v284 = vunpack.c.l.b16 %v243
    %v285 = vunpack.c.l.b16 %v244
    %v286 = vunpack.c.l.b16 %v245
    %v287 = vunpack.c.l.b16 %v246
    %v288 = vunpack.c.l.b16 %v247
    %v289 = vunpack.c.l.b16 %v248
    %v290 = vunpack.c.l.b16 %v249
    %v291 = vunpack.c.l.b16 %v250
    %v292 = vunpack.c.l.b16 %v251
    %v293 = vunpack.c.l.b16 %v252
    %v294 = vunpack.c.l.b16 %v253
    %v295 = vunpack.c.l.b16 %v254
    %v296 = vpack.c.b16 %v281, %v280
    %v297 = vpack.c.b16 %v283, %v282
    %v298 = vpack.c.b16 %v285, %v284
    %v299 = vpack.c.b16 %v287, %v286
    %v300 = vpack.c.b16 %v289, %v288
    %v301 = vpack.c.b16 %v291, %v290
    %v302 = vpack.c.b16 %v293, %v292
    %v303 = vpack.c.b16 %v295, %v294
    %312 = vmatprep.subr.bf16.mxu0 0
    %313 = vmatpush1.bf16.msra.mxu0 %v296
    %314 = vmatprep.subr.bf16.mxu0 0
    %315 = vmatpush1.bf16.msra.mxu0 %v297
    %316 = vmatprep.subr.bf16.mxu0 0
    %317 = vmatpush1.bf16.msra.mxu0 %v298
    %318 = vmatprep.subr.bf16.mxu0 0
    %319 = vmatpush1.bf16.msra.mxu0 %v299
    %320 = vmatprep.subr.bf16.mxu0 0
    %321 = vmatpush1.bf16.msra.mxu0 %v300
    %322 = vmatprep.subr.bf16.mxu0 0
    %323 = vmatpush1.bf16.msra.mxu0 %v301
    %324 = vmatprep.subr.bf16.mxu0 0
    %325 = vmatpush1.bf16.msra.mxu0 %v302
    %326 = vmatprep.subr.bf16.mxu0 0
    %327 = vmatpush1.bf16.msra.mxu0 %v303
    %328 = vmatprep.subr.bf16.mxu0 0
    %329 = vmatpush1.bf16.msra.mxu0 0
    %330 = vmatprep.subr.bf16.mxu0 0
    %331 = vmatpush1.bf16.msra.mxu0 0
    %332 = vmatprep.subr.bf16.mxu0 0
    %333 = vmatpush1.bf16.msra.mxu0 0
    %334 = vmatprep.subr.bf16.mxu0 0
    %335 = vmatpush1.bf16.msra.mxu0 0
    %336 = vmatprep.subr.bf16.mxu0 0
    %337 = vmatpush1.bf16.msra.mxu0 0
    %338 = vmatprep.subr.bf16.mxu0 0
    %339 = vmatpush1.bf16.msra.mxu0 0
    %340 = vmatprep.subr.bf16.mxu0 0
    %341 = vmatpush1.bf16.msra.mxu0 0
    %342 = vmatprep.subr.bf16.mxu0 0
    %343 = vmatpush1.bf16.msra.mxu0 0
    %344 = vmatprep.mubr.bf16.mxu0 0
    %345 = vmatmul.mubr.bf16.gmra.mrb[0].mxu0 %v255
    %v346 = vpop.f32.mrb[0].mxu0
    %v347 = vadd.f32 %v262, %v346
    %v348 = vpop.f32.mrb[0].mxu0
    %v349 = vpop.f32.mrb[0].mxu0
    %v350 = vadd.f32 %v262, %v349
    %v351 = vpop.f32.mrb[0].mxu0
    %352 = vdwg.mxu0
    %v353 = vmax.f32 %v347, 0.0
    %v354 = vmax.f32 %v350, 0.0
    %s355 = scalar_lea.vmem [#allocation5], 192
    %v356 = vld [vmem:[%s355] sm:$0xf]
    %v357 = vld [vmem:[%s355 + $0x4] sm:$0xf]
    %v358 = vld [vmem:[%s355 + $0x8] sm:$0xf]
    %v359 = vld [vmem:[%s355 + $0xc] sm:$0xf]
    %v360 = vld [vmem:[%s355 + $0x10] sm:$0xf]
    %v361 = vld [vmem:[%s355 + $0x14] sm:$0xf]
    %v362 = vld [vmem:[%s355 + $0x18] sm:$0xf]
    %v363 = vld [vmem:[%s355 + $0x1c] sm:$0xf]
    %v364 = vld [vmem:[%s355 + $0x20] sm:$0xf]
    %v365 = vld [vmem:[%s355 + $0x24] sm:$0xf]
    %v366 = vld [vmem:[%s355 + $0x28] sm:$0xf]
    %v367 = vld [vmem:[%s355 + $0x2c] sm:$0xf]
    %v368 = vld [vmem:[%s355 + $0x30] sm:$0xf]
    %v369 = vld [vmem:[%s355 + $0x34] sm:$0xf]
    %v370 = vld [vmem:[%s355 + $0x38] sm:$0xf]
    %v371 = vld [vmem:[%s355 + $0x3c] sm:$0xf]
    %v372 = vpack.c.bf16 %v354, %v353
    %s373 = scalar_lea.vmem %s2, 3
    %v374 = vld [vmem:[%s373] sm:$0x1]
    %v376 = vlaneseq
    %v377 = vshrl.u32 %v376, 7
    %v378 = vsub.s32 0, %v377
    %v379 = vrot.slane %v374, %v378
    %v397 = vunpack.c.l.b16 %v356
    %v398 = vunpack.c.l.b16 %v357
    %v399 = vunpack.c.l.b16 %v358
    %v400 = vunpack.c.l.b16 %v359
    %v401 = vunpack.c.l.b16 %v360
    %v402 = vunpack.c.l.b16 %v361
    %v403 = vunpack.c.l.b16 %v362
    %v404 = vunpack.c.l.b16 %v363
    %v405 = vunpack.c.l.b16 %v364
    %v406 = vunpack.c.l.b16 %v365
    %v407 = vunpack.c.l.b16 %v366
    %v408 = vunpack.c.l.b16 %v367
    %v409 = vunpack.c.l.b16 %v368
    %v410 = vunpack.c.l.b16 %v369
    %v411 = vunpack.c.l.b16 %v370
    %v412 = vunpack.c.l.b16 %v371
    %v413 = vpack.c.b16 %v398, %v397
    %v414 = vpack.c.b16 %v400, %v399
    %v415 = vpack.c.b16 %v402, %v401
    %v416 = vpack.c.b16 %v404, %v403
    %v417 = vpack.c.b16 %v406, %v405
    %v418 = vpack.c.b16 %v408, %v407
    %v419 = vpack.c.b16 %v410, %v409
    %v420 = vpack.c.b16 %v412, %v411
    %429 = vmatprep.subr.bf16.mxu0 0
    %430 = vmatpush1.bf16.msra.mxu0 %v413
    %431 = vmatprep.subr.bf16.mxu0 0
    %432 = vmatpush1.bf16.msra.mxu0 %v414
    %433 = vmatprep.subr.bf16.mxu0 0
    %434 = vmatpush1.bf16.msra.mxu0 %v415
    %435 = vmatprep.subr.bf16.mxu0 0
    %436 = vmatpush1.bf16.msra.mxu0 %v416
    %437 = vmatprep.subr.bf16.mxu0 0
    %438 = vmatpush1.bf16.msra.mxu0 %v417
    %439 = vmatprep.subr.bf16.mxu0 0
    %440 = vmatpush1.bf16.msra.mxu0 %v418
    %441 = vmatprep.subr.bf16.mxu0 0
    %442 = vmatpush1.bf16.msra.mxu0 %v419
    %443 = vmatprep.subr.bf16.mxu0 0
    %444 = vmatpush1.bf16.msra.mxu0 %v420
    %445 = vmatprep.subr.bf16.mxu0 0
    %446 = vmatpush1.bf16.msra.mxu0 0
    %447 = vmatprep.subr.bf16.mxu0 0
    %448 = vmatpush1.bf16.msra.mxu0 0
    %449 = vmatprep.subr.bf16.mxu0 0
    %450 = vmatpush1.bf16.msra.mxu0 0
    %451 = vmatprep.subr.bf16.mxu0 0
    %452 = vmatpush1.bf16.msra.mxu0 0
    %453 = vmatprep.subr.bf16.mxu0 0
    %454 = vmatpush1.bf16.msra.mxu0 0
    %455 = vmatprep.subr.bf16.mxu0 0
    %456 = vmatpush1.bf16.msra.mxu0 0
    %457 = vmatprep.subr.bf16.mxu0 0
    %458 = vmatpush1.bf16.msra.mxu0 0
    %459 = vmatprep.subr.bf16.mxu0 0
    %460 = vmatpush1.bf16.msra.mxu0 0
    %461 = vmatprep.mubr.bf16.mxu0 0
    %462 = vmatmul.mubr.bf16.gmra.mrb[0].mxu0 %v372
    %v463 = vpop.f32.mrb[0].mxu0
    %v464 = vadd.f32 %v379, %v463
    %v465 = vpop.f32.mrb[0].mxu0
    %v466 = vpop.f32.mrb[0].mxu0
    %v467 = vadd.f32 %v379, %v466
    %v468 = vpop.f32.mrb[0].mxu0
    %469 = vdwg.mxu0
    %v470 = vmax.f32 %v464, 0.0
    %v471 = vmax.f32 %v467, 0.0
    %s472 = scalar_lea.vmem [#allocation5], 256
    %v473 = vld [vmem:[%s472] sm:$0xf]
    %v474 = vld [vmem:[%s472 + $0x4] sm:$0xf]
    %v475 = vld [vmem:[%s472 + $0x8] sm:$0xf]
    %v476 = vld [vmem:[%s472 + $0xc] sm:$0xf]
    %v477 = vld [vmem:[%s472 + $0x10] sm:$0xf]
    %v478 = vld [vmem:[%s472 + $0x14] sm:$0xf]
    %v479 = vld [vmem:[%s472 + $0x18] sm:$0xf]
    %v480 = vld [vmem:[%s472 + $0x1c] sm:$0xf]
    %v481 = vld [vmem:[%s472 + $0x20] sm:$0xf]
    %v482 = vld [vmem:[%s472 + $0x24] sm:$0xf]
    %v483 = vld [vmem:[%s472 + $0x28] sm:$0xf]
    %v484 = vld [vmem:[%s472 + $0x2c] sm:$0xf]
    %v485 = vld [vmem:[%s472 + $0x30] sm:$0xf]
    %v486 = vld [vmem:[%s472 + $0x34] sm:$0xf]
    %v487 = vld [vmem:[%s472 + $0x38] sm:$0xf]
    %v488 = vld [vmem:[%s472 + $0x3c] sm:$0xf]
    %v489 = vpack.c.bf16 %v471, %v470
    %s490 = scalar_lea.vmem %s2, 4
    %v491 = vld [vmem:[%s490] sm:$0x1]
    %v493 = vlaneseq
    %v494 = vshrl.u32 %v493, 7
    %v495 = vsub.s32 0, %v494
    %v496 = vrot.slane %v491, %v495
    %v514 = vunpack.c.l.b16 %v473
    %v515 = vunpack.c.l.b16 %v474
    %v516 = vunpack.c.l.b16 %v475
    %v517 = vunpack.c.l.b16 %v476
    %v518 = vunpack.c.l.b16 %v477
    %v519 = vunpack.c.l.b16 %v478
    %v520 = vunpack.c.l.b16 %v479
    %v521 = vunpack.c.l.b16 %v480
    %v522 = vunpack.c.l.b16 %v481
    %v523 = vunpack.c.l.b16 %v482
    %v524 = vunpack.c.l.b16 %v483
    %v525 = vunpack.c.l.b16 %v484
    %v526 = vunpack.c.l.b16 %v485
    %v527 = vunpack.c.l.b16 %v486
    %v528 = vunpack.c.l.b16 %v487
    %v529 = vunpack.c.l.b16 %v488
    %v530 = vpack.c.b16 %v515, %v514
    %v531 = vpack.c.b16 %v517, %v516
    %v532 = vpack.c.b16 %v519, %v518
    %v533 = vpack.c.b16 %v521, %v520
    %v534 = vpack.c.b16 %v523, %v522
    %v535 = vpack.c.b16 %v525, %v524
    %v536 = vpack.c.b16 %v527, %v526
    %v537 = vpack.c.b16 %v529, %v528
    %546 = vmatprep.subr.bf16.mxu0 0
    %547 = vmatpush1.bf16.msra.mxu0 %v530
    %548 = vmatprep.subr.bf16.mxu0 0
    %549 = vmatpush1.bf16.msra.mxu0 %v531
    %550 = vmatprep.subr.bf16.mxu0 0
    %551 = vmatpush1.bf16.msra.mxu0 %v532
    %552 = vmatprep.subr.bf16.mxu0 0
    %553 = vmatpush1.bf16.msra.mxu0 %v533
    %554 = vmatprep.subr.bf16.mxu0 0
    %555 = vmatpush1.bf16.msra.mxu0 %v534
    %556 = vmatprep.subr.bf16.mxu0 0
    %557 = vmatpush1.bf16.msra.mxu0 %v535
    %558 = vmatprep.subr.bf16.mxu0 0
    %559 = vmatpush1.bf16.msra.mxu0 %v536
    %560 = vmatprep.subr.bf16.mxu0 0
    %561 = vmatpush1.bf16.msra.mxu0 %v537
    %562 = vmatprep.subr.bf16.mxu0 0
    %563 = vmatpush1.bf16.msra.mxu0 0
    %564 = vmatprep.subr.bf16.mxu0 0
    %565 = vmatpush1.bf16.msra.mxu0 0
    %566 = vmatprep.subr.bf16.mxu0 0
    %567 = vmatpush1.bf16.msra.mxu0 0
    %568 = vmatprep.subr.bf16.mxu0 0
    %569 = vmatpush1.bf16.msra.mxu0 0
    %570 = vmatprep.subr.bf16.mxu0 0
    %571 = vmatpush1.bf16.msra.mxu0 0
    %572 = vmatprep.subr.bf16.mxu0 0
    %573 = vmatpush1.bf16.msra.mxu0 0
    %574 = vmatprep.subr.bf16.mxu0 0
    %575 = vmatpush1.bf16.msra.mxu0 0
    %576 = vmatprep.subr.bf16.mxu0 0
    %577 = vmatpush1.bf16.msra.mxu0 0
    %578 = vmatprep.mubr.bf16.mxu0 0
    %579 = vmatmul.mubr.bf16.gmra.mrb[0].mxu0 %v489
    %v580 = vpop.f32.mrb[0].mxu0
    %v581 = vadd.f32 %v496, %v580
    %v582 = vpop.f32.mrb[0].mxu0
    %v583 = vpop.f32.mrb[0].mxu0
    %v584 = vadd.f32 %v496, %v583
    %v585 = vpop.f32.mrb[0].mxu0
    %586 = vdwg.mxu0
    %v587 = vlaneseq
    %v588 = vand.u32 %v587, 127
    %vm589 = vcmp.lt.s32.totalorder %v588, 20
    %v590 = vmax.f32 %v581, 0.0
    %v591 = vmax.f32 %v584, 0.0
    %v592 = vsel %vm589, %v590, %v581
    %v593 = vsel %vm589, %v591, %v584
    %s594 = scalar_lea.vmem [#allocation5], 320
    %v595 = vld [vmem:[%s594] sm:$0xf]
    %v596 = vld [vmem:[%s594 + $0x4] sm:$0xf]
    %v597 = vld [vmem:[%s594 + $0x8] sm:$0xf]
    %v598 = vld [vmem:[%s594 + $0xc] sm:$0xf]
    %v599 = vld [vmem:[%s594 + $0x10] sm:$0xf]
    %v600 = vld [vmem:[%s594 + $0x14] sm:$0xf]
    %v601 = vld [vmem:[%s594 + $0x18] sm:$0xf]
    %v602 = vld [vmem:[%s594 + $0x1c] sm:$0xf]
    %v603 = vld [vmem:[%s594 + $0x20] sm:$0xf]
    %v604 = vld [vmem:[%s594 + $0x24] sm:$0xf]
    %v605 = vld [vmem:[%s594 + $0x28] sm:$0xf]
    %v606 = vld [vmem:[%s594 + $0x2c] sm:$0xf]
    %v607 = vld [vmem:[%s594 + $0x30] sm:$0xf]
    %v608 = vld [vmem:[%s594 + $0x34] sm:$0xf]
    %v609 = vld [vmem:[%s594 + $0x38] sm:$0xf]
    %v610 = vld [vmem:[%s594 + $0x3c] sm:$0xf]
    %v611 = vpack.c.bf16 %v593, %v592
    %s612 = scalar_lea.vmem %s2, 5
    %v613 = vld [vmem:[%s612] sm:$0x1]
    %v615 = vlaneseq
    %v616 = vshrl.u32 %v615, 7
    %v617 = vsub.s32 0, %v616
    %v618 = vrot.slane %v613, %v617
    %v636 = vunpack.c.l.b16 %v595
    %v637 = vunpack.c.l.b16 %v596
    %v638 = vunpack.c.l.b16 %v597
    %v639 = vunpack.c.l.b16 %v598
    %v640 = vunpack.c.l.b16 %v599
    %v641 = vunpack.c.l.b16 %v600
    %v642 = vunpack.c.l.b16 %v601
    %v643 = vunpack.c.l.b16 %v602
    %v644 = vunpack.c.l.b16 %v603
    %v645 = vunpack.c.l.b16 %v604
    %v646 = vunpack.c.l.b16 %v605
    %v647 = vunpack.c.l.b16 %v606
    %v648 = vunpack.c.l.b16 %v607
    %v649 = vunpack.c.l.b16 %v608
    %v650 = vunpack.c.l.b16 %v609
    %v651 = vunpack.c.l.b16 %v610
    %v652 = vpack.c.b16 %v637, %v636
    %v653 = vpack.c.b16 %v639, %v638
    %v654 = vpack.c.b16 %v641, %v640
    %v655 = vpack.c.b16 %v643, %v642
    %v656 = vpack.c.b16 %v645, %v644
    %v657 = vpack.c.b16 %v647, %v646
    %v658 = vpack.c.b16 %v649, %v648
    %v659 = vpack.c.b16 %v651, %v650
    %668 = vmatprep.subr.bf16.mxu0 0
    %669 = vmatpush1.bf16.msra.mxu0 %v652
    %670 = vmatprep.subr.bf16.mxu0 0
    %671 = vmatpush1.bf16.msra.mxu0 %v653
    %672 = vmatprep.subr.bf16.mxu0 0
    %673 = vmatpush1.bf16.msra.mxu0 %v654
    %674 = vmatprep.subr.bf16.mxu0 0
    %675 = vmatpush1.bf16.msra.mxu0 %v655
    %676 = vmatprep.subr.bf16.mxu0 0
    %677 = vmatpush1.bf16.msra.mxu0 %v656
    %678 = vmatprep.subr.bf16.mxu0 0
    %679 = vmatpush1.bf16.msra.mxu0 %v657
    %680 = vmatprep.subr.bf16.mxu0 0
    %681 = vmatpush1.bf16.msra.mxu0 %v658
    %682 = vmatprep.subr.bf16.mxu0 0
    %683 = vmatpush1.bf16.msra.mxu0 %v659
    %684 = vmatprep.subr.bf16.mxu0 0
    %685 = vmatpush1.bf16.msra.mxu0 0
    %686 = vmatprep.subr.bf16.mxu0 0
    %687 = vmatpush1.bf16.msra.mxu0 0
    %688 = vmatprep.subr.bf16.mxu0 0
    %689 = vmatpush1.bf16.msra.mxu0 0
    %690 = vmatprep.subr.bf16.mxu0 0
    %691 = vmatpush1.bf16.msra.mxu0 0
    %692 = vmatprep.subr.bf16.mxu0 0
    %693 = vmatpush1.bf16.msra.mxu0 0
    %694 = vmatprep.subr.bf16.mxu0 0
    %695 = vmatpush1.bf16.msra.mxu0 0
    %696 = vmatprep.subr.bf16.mxu0 0
    %697 = vmatpush1.bf16.msra.mxu0 0
    %698 = vmatprep.subr.bf16.mxu0 0
    %699 = vmatpush1.bf16.msra.mxu0 0
    %700 = vmatprep.mubr.bf16.mxu0 0
    %701 = vmatmul.mubr.bf16.gmra.mrb[0].mxu0 %v611
    %v702 = vpop.f32.mrb[0].mxu0
    %v703 = vadd.f32 %v618, %v702
    %v704 = vpop.f32.mrb[0].mxu0
    %v705 = vpop.f32.mrb[0].mxu0
    %v706 = vadd.f32 %v618, %v705
    %v707 = vpop.f32.mrb[0].mxu0
    %708 = vdwg.mxu0
    %v709 = vpack.c.bf16 %v706, %v703
    %v711 = vunpack.c.l.b16 %v709
    %v712 = vunpack.c.h.b16 %v709
    %v713 = vpack.c.b16 %v711, %v711
    %v714 = vpack.c.b16 %v712, %v712
    %717 = vst [vmem:[#allocation7] sm:$0xf] %v713
    %718 = vst [vmem:[#allocation7 + $0x4] sm:$0xf] %v714
    // Predicated region
    $region22: #{tpu_custom_call.1} parent=1 // pred_check
      _
    $region23: #{tpu_custom_call.1} parent=1 // pred_check_branch
      %720 = sbr.rel (0) target = $region25
    $region24: #{tpu_custom_call.1} parent=1 // pred_region
      %s722 = ssub.s32 128, 128
      %723 = vsyncadd [#allocation4], %s722
      %s724 = sshll.u32 [#allocation7], 4
      %s725 = int_to_ptr.vmem [resolvable:$true] %s724
      %730 = dma.vmem_to_hbm [thread:$0]  %s725, 128, %s3, [#allocation4], 64, 64, 4
    $region25: #{tpu_custom_call.1} parent=1 // pred_fallthru
      _
    // Predicated region
    $region26: #{tpu_custom_call.1} parent=1 // pred_check
      _
    $region27: #{tpu_custom_call.1} parent=1 // pred_check_branch
      %732 = sbr.rel (0) target = $region29
    $region28: #{tpu_custom_call.1} parent=1 // pred_region
      %733 = dma.done [#allocation4], 128
    $region29: #{tpu_custom_call.1} parent=1 // pred_fallthru
      _
    %734 = vsyncpa [#allocation3], 1
    %735 = vsyncpa [#allocation6], 1
    %736 = vsyncpa [#allocation4], 1

</llo_original>
